<compile_context>
chip_gen: v7x
topology: tpu7x:2x2x1
jax: 0.10.0
libtpu: 0.0.40
codegen_flags: <defaults>
</compile_context>

<pallas_src>
import math

import jax
import jax.numpy as jnp
from jax.experimental import pallas as pl
from jax.experimental.pallas import tpu as pltpu


def _round_up(x, m):
    return ((x + m - 1) // m) * m


def _vmem_capacity_bytes():
    """Chip-aware VMEM capacity (v7x: 64 MiB/TC, v5e/v6e: 128 MiB)."""
    try:
        cap = int(getattr(pltpu.get_tpu_info(), "vmem_capacity_bytes", 0))
        if cap > 0:
            return cap
    except Exception:
        pass
    return 64 << 20  # conservative fallback (covers v7x)


def _vmem_estimate(tm, H, act_bytes):
    """Rough resident-VMEM estimate for one grid step (lane-padded)."""
    Hl = _round_up(H, 128)
    acts = 2 * (tm * Hl * act_bytes) * 2      # x, h tiles, double-buffered
    outs = (tm * 2 * Hl * act_bytes) * 2      # out tile, double-buffered
    wts = 2 * (Hl * Hl * act_bytes)           # w1t, w2t, single-buffered
    bias = Hl * 4
    return acts + outs + wts + bias


def _gate_conc_kernel(x_ref, h_ref, w1t_ref, w2t_ref, b_ref, out_ref):
    # x_ref, h_ref     : (tm, H)   activations, native dtype
    # w1t_ref, w2t_ref : (H, H)    pre-transposed weights (resident)
    # b_ref            : (1, H)    f32 bias
    # out_ref          : (tm, 2H)
    x = x_ref[...]
    h = h_ref[...]

    # Native (M,K)x(K,N) contraction on the MXU; f32 accumulation.
    gated = (
        jnp.dot(x, w1t_ref[...], preferred_element_type=jnp.float32)
        + jnp.dot(h, w2t_ref[...], preferred_element_type=jnp.float32)
        + b_ref[...]
    )
    gate = jax.nn.sigmoid(gated)  # gate / elementwise math in f32 (v5e-safe)

    H = x.shape[-1]
    out_ref[:, :H] = (x.astype(jnp.float32) * gate).astype(out_ref.dtype)
    out_ref[:, H:] = (h.astype(jnp.float32) * (1.0 - gate)).astype(out_ref.dtype)


def _pallas_call_2d(x2d, h2d, w1t, w2t, b2d, *, tm, vmem_limit,
                    single_buffer_weights):
    M, H = x2d.shape

    def const_spec(shape):
        idx = lambda i: (0,) * len(shape)
        if single_buffer_weights:
            # Constant index_map -> the block never changes; one buffer is enough.
            return pl.BlockSpec(shape, idx, pipeline_mode=pl.Buffered(1))
        return pl.BlockSpec(shape, idx)

    return pl.pallas_call(
        _gate_conc_kernel,
        out_shape=jax.ShapeDtypeStruct((M, 2 * H), x2d.dtype),
        grid_spec=pltpu.PrefetchScalarGridSpec(
            num_scalar_prefetch=0,
            grid=(pl.cdiv(M, tm),),          # unpadded M; trailing block masked
            in_specs=[
                pl.BlockSpec((tm, H), lambda i: (i, 0)),   # input rows
                pl.BlockSpec((tm, H), lambda i: (i, 0)),   # hidden rows
                const_spec((H, H)),                         # w1.T (resident)
                const_spec((H, H)),                         # w2.T (resident)
                const_spec((1, H)),                         # bias (resident)
            ],
            out_specs=pl.BlockSpec((tm, 2 * H), lambda i: (i, 0)),
        ),
        compiler_params=pltpu.CompilerParams(
            dimension_semantics=("parallel",),   # row grid shards across TCs
            vmem_limit_bytes=vmem_limit,
        ),
    )(x2d, h2d, w1t, w2t, b2d)


def gate_conc_mechanism(inp, hid, w1, w2, bias, *, tm=512):
    """inp, hid: (B, S, H); w1, w2: (H, H); bias: (H,) -> (B, S, 2H).

    tm is the row tile: default 512, sweep 256-1024 on v5e/v6e/v7x; it is
    clamped to the problem size and shrunk automatically if the VMEM estimate
    does not fit the chip's per-TensorCore capacity.
    """
    B, S, H = inp.shape
    M = B * S
    act_dtype = inp.dtype

    x2d = inp.reshape(M, H)
    h2d = hid.reshape(M, H)

    # Pre-transpose once (H^2 bytes, negligible) and match the activation
    # dtype so the MXU runs its full-rate path; bias stays f32 for the f32 add.
    w1t = jnp.asarray(w1.T, dtype=act_dtype)
    w2t = jnp.asarray(w2.T, dtype=act_dtype)
    b2d = bias.astype(jnp.float32).reshape(1, H)

    cap = _vmem_capacity_bytes()
    budget = cap - (8 << 20)
    act_b = jnp.dtype(act_dtype).itemsize

    tm_eff = min(max(int(tm), 8), _round_up(M, 8))
    tm_eff = _round_up(tm_eff, 8)
    while tm_eff > 64 and _vmem_estimate(tm_eff, H, act_b) > budget:
        tm_eff //= 2

    est = _vmem_estimate(tm_eff, H, act_b)
    vmem_limit = max(int(est * 1.5) + (4 << 20), 16 << 20)
    vmem_limit = min(vmem_limit, cap - (2 << 20))

    try:
        out2d = _pallas_call_2d(x2d, h2d, w1t, w2t, b2d, tm=tm_eff,
                                vmem_limit=vmem_limit,
                                single_buffer_weights=True)
    except Exception:
        # Fallback only for jax builds where BlockSpec pipeline_mode=Buffered(1)
        # is unavailable; identical semantics with default double buffering.
        # Genuine failures (e.g. VMEM OOM) re-raise from this second call.
        out2d = _pallas_call_2d(x2d, h2d, w1t, w2t, b2d, tm=tm_eff,
                                vmem_limit=vmem_limit,
                                single_buffer_weights=False)

    return out2d.reshape(B, S, 2 * H)


def init_params(hidden_size, key):
    """Deterministic init matching the PyTorch reset_parameters() recipe."""
    k1, k2, k3 = jax.random.split(key, 3)
    stdv1 = 1.0 / math.sqrt(hidden_size)
    stdv2 = 1.0 / math.sqrt(hidden_size)
    stdv = (stdv1 + stdv2) / 2.0
    w1 = jax.random.uniform(k1, (hidden_size, hidden_size),
                            minval=-stdv1, maxval=stdv1, dtype=jnp.float32)
    w2 = jax.random.uniform(k2, (hidden_size, hidden_size),
                            minval=-stdv2, maxval=stdv2, dtype=jnp.float32)
    bias = jax.random.uniform(k3, (hidden_size,),
                              minval=-stdv, maxval=stdv, dtype=jnp.float32)
    return w1, w2, bias


if __name__ == "__main__":
    B, S, H = 2, 8, 32
    key = jax.random.PRNGKey(0)
    kx, kh, kp = jax.random.split(key, 3)

    x = jax.random.normal(kx, (B, S, H), dtype=jnp.float32)
    h = jax.random.normal(kh, (B, S, H), dtype=jnp.float32)
    w1, w2, bias = init_params(H, kp)

    out = jax.block_until_ready(gate_conc_mechanism(x, h, w1, w2, bias))

    # Pure-JAX reference check of the forward semantics.
    gated = x @ w1.T + h @ w2.T + bias
    gate = jax.nn.sigmoid(gated)
    ref = jnp.concatenate([x * gate, h * (1.0 - gate)], axis=2)
    assert out.shape == (B, S, 2 * H)
    assert jnp.allclose(out, ref, atol=1e-5, rtol=1e-5)

    print("KERNEL_OK")
</pallas_src>

<mosaic_0001>
module attributes {stable_mosaic.version = 11 : i64} {
  func.func @_gate_conc_kernel(%arg0: i32, %arg1: memref<16x32xf32, #tpu.memory_space<vmem>>, %arg2: memref<16x32xf32, #tpu.memory_space<vmem>>, %arg3: memref<32x32xf32, #tpu.memory_space<vmem>>, %arg4: memref<32x32xf32, #tpu.memory_space<vmem>>, %arg5: memref<1x32xf32, #tpu.memory_space<vmem>>, %arg6: memref<16x64xf32, #tpu.memory_space<vmem>>) attributes {dimension_semantics = [#tpu.dimension_semantics<parallel>], iteration_bounds = array<i64: 1>, scalar_prefetch = 0 : i64, scratch_operands = 0 : i64, tpu.core_type = #tpu.core_type<tc>, window_params = [{transform_indices = @transform_0, window_bounds = array<i64: 16, 32>}, {transform_indices = @transform_1, window_bounds = array<i64: 16, 32>}, {pipeline_mode = #tpu.pipeline_mode<synchronous>, transform_indices = @transform_2, window_bounds = array<i64: 32, 32>}, {pipeline_mode = #tpu.pipeline_mode<synchronous>, transform_indices = @transform_3, window_bounds = array<i64: 32, 32>}, {pipeline_mode = #tpu.pipeline_mode<synchronous>, transform_indices = @transform_4, window_bounds = array<i64: 1, 32>}, {transform_indices = @transform_5, window_bounds = array<i64: 16, 64>}]} {
    %c0 = arith.constant 0 : index
    %c0_0 = arith.constant 0 : index
    %0 = vector.load %arg1[%c0, %c0_0] : memref<16x32xf32, #tpu.memory_space<vmem>>, vector<16x32xf32>
    %c0_1 = arith.constant 0 : index
    %c0_2 = arith.constant 0 : index
    %1 = vector.load %arg2[%c0_1, %c0_2] : memref<16x32xf32, #tpu.memory_space<vmem>>, vector<16x32xf32>
    %c0_3 = arith.constant 0 : index
    %c0_4 = arith.constant 0 : index
    %2 = vector.load %arg3[%c0_3, %c0_4] : memref<32x32xf32, #tpu.memory_space<vmem>>, vector<32x32xf32>
    %cst = arith.constant dense<0.000000e+00> : vector<16x32xf32>
    %3 = tpu.matmul %0, %2, %cst {dimension_numbers = #tpu.dot_dimension_numbers<[1], [0], [0], [1], [0, 0, 1, 1], [], []>} : vector<16x32xf32>, vector<32x32xf32>, vector<16x32xf32> -> vector<16x32xf32>
    %c0_5 = arith.constant 0 : index
    %c0_6 = arith.constant 0 : index
    %4 = vector.load %arg4[%c0_5, %c0_6] : memref<32x32xf32, #tpu.memory_space<vmem>>, vector<32x32xf32>
    %cst_7 = arith.constant dense<0.000000e+00> : vector<16x32xf32>
    %5 = tpu.matmul %1, %4, %cst_7 {dimension_numbers = #tpu.dot_dimension_numbers<[1], [0], [0], [1], [0, 0, 1, 1], [], []>} : vector<16x32xf32>, vector<32x32xf32>, vector<16x32xf32> -> vector<16x32xf32>
    %6 = arith.addf %3, %5 : vector<16x32xf32>
    %c0_8 = arith.constant 0 : index
    %c0_9 = arith.constant 0 : index
    %7 = vector.load %arg5[%c0_8, %c0_9] : memref<1x32xf32, #tpu.memory_space<vmem>>, vector<1x32xf32>
    %8 = vector.broadcast %7 : vector<1x32xf32> to vector<16x32xf32>
    %9 = arith.addf %6, %8 : vector<16x32xf32>
    %10 = arith.negf %9 : vector<16x32xf32>
    %11 = math.exp %10 : vector<16x32xf32>
    %cst_10 = arith.constant 1.000000e+00 : f32
    %12 = vector.broadcast %cst_10 : f32 to vector<16x32xf32>
    %13 = arith.addf %12, %11 : vector<16x32xf32>
    %14 = arith.divf %12, %13 : vector<16x32xf32>
    %15 = arith.mulf %0, %14 : vector<16x32xf32>
    %c0_11 = arith.constant 0 : index
    %c0_12 = arith.constant 0 : index
    %16 = vector.load %arg6[%c0_11, %c0_12] : memref<16x64xf32, #tpu.memory_space<vmem>>, vector<16x32xf32>
    tpu.vector_store %arg6[%c0_11, %c0_12], %15 {strides = array<i32>} : memref<16x64xf32, #tpu.memory_space<vmem>>, vector<16x32xf32>,
    %cst_13 = arith.constant 1.000000e+00 : f32
    %17 = vector.broadcast %cst_13 : f32 to vector<16x32xf32>
    %18 = arith.subf %17, %14 : vector<16x32xf32>
    %19 = arith.mulf %1, %18 : vector<16x32xf32>
    %c0_14 = arith.constant 0 : index
    %c32 = arith.constant 32 : index
    %20 = vector.load %arg6[%c0_14, %c32] : memref<16x64xf32, #tpu.memory_space<vmem>>, vector<16x32xf32>
    tpu.vector_store %arg6[%c0_14, %c32], %19 {strides = array<i32>} : memref<16x64xf32, #tpu.memory_space<vmem>>, vector<16x32xf32>,
    return
  }
  func.func @transform_0(%arg0: i32) -> (i32, i32) {
    %c0_i32 = arith.constant 0 : i32
    %c0_i32_0 = arith.constant 0 : i32
    return %arg0, %c0_i32 : i32, i32
  }
  func.func @transform_1(%arg0: i32) -> (i32, i32) {
    %c0_i32 = arith.constant 0 : i32
    %c0_i32_0 = arith.constant 0 : i32
    return %arg0, %c0_i32 : i32, i32
  }
  func.func @transform_2(%arg0: i32) -> (i32, i32) {
    %c0_i32 = arith.constant 0 : i32
    %c0_i32_0 = arith.constant 0 : i32
    %c0_i32_1 = arith.constant 0 : i32
    return %c0_i32, %c0_i32_0 : i32, i32
  }
  func.func @transform_3(%arg0: i32) -> (i32, i32) {
    %c0_i32 = arith.constant 0 : i32
    %c0_i32_0 = arith.constant 0 : i32
    %c0_i32_1 = arith.constant 0 : i32
    return %c0_i32, %c0_i32_0 : i32, i32
  }
  func.func @transform_4(%arg0: i32) -> (i32, i32) {
    %c0_i32 = arith.constant 0 : i32
    %c0_i32_0 = arith.constant 0 : i32
    %c0_i32_1 = arith.constant 0 : i32
    return %c0_i32, %c0_i32_0 : i32, i32
  }
  func.func @transform_5(%arg0: i32) -> (i32, i32) {
    %c0_i32 = arith.constant 0 : i32
    %c0_i32_0 = arith.constant 0 : i32
    return %arg0, %c0_i32 : i32, i32
  }
}

module attributes {stable_mosaic.version = 11 : i64} {
  func.func @_gate_conc_kernel(%arg0: i32, %arg1: memref<16x32xf32, #tpu.memory_space<vmem>>, %arg2: memref<16x32xf32, #tpu.memory_space<vmem>>, %arg3: memref<32x32xf32, #tpu.memory_space<vmem>>, %arg4: memref<32x32xf32, #tpu.memory_space<vmem>>, %arg5: memref<1x32xf32, #tpu.memory_space<vmem>>, %arg6: memref<16x64xf32, #tpu.memory_space<vmem>>) attributes {dimension_semantics = [#tpu.dimension_semantics<parallel>], iteration_bounds = array<i64: 1>, scalar_prefetch = 0 : i64, scratch_operands = 0 : i64, tpu.core_type = #tpu.core_type<tc>, window_params = [{transform_indices = @transform_0, window_bounds = array<i64: 16, 32>}, {transform_indices = @transform_1, window_bounds = array<i64: 16, 32>}, {pipeline_mode = #tpu.pipeline_mode<synchronous>, transform_indices = @transform_2, window_bounds = array<i64: 32, 32>}, {pipeline_mode = #tpu.pipeline_mode<synchronous>, transform_indices = @transform_3, window_bounds = array<i64: 32, 32>}, {pipeline_mode = #tpu.pipeline_mode<synchronous>, transform_indices = @transform_4, window_bounds = array<i64: 1, 32>}, {transform_indices = @transform_5, window_bounds = array<i64: 16, 64>}]} {
    %c0 = arith.constant 0 : index
    %c0_0 = arith.constant 0 : index
    %0 = vector.load %arg1[%c0, %c0_0] : memref<16x32xf32, #tpu.memory_space<vmem>>, vector<16x32xf32>
    %c0_1 = arith.constant 0 : index
    %c0_2 = arith.constant 0 : index
    %1 = vector.load %arg2[%c0_1, %c0_2] : memref<16x32xf32, #tpu.memory_space<vmem>>, vector<16x32xf32>
    %c0_3 = arith.constant 0 : index
    %c0_4 = arith.constant 0 : index
    %2 = vector.load %arg3[%c0_3, %c0_4] : memref<32x32xf32, #tpu.memory_space<vmem>>, vector<32x32xf32>
    %cst = arith.constant dense<0.000000e+00> : vector<16x32xf32>
    %3 = tpu.matmul %0, %2, %cst {dimension_numbers = #tpu.dot_dimension_numbers<[1], [0], [0], [1], [0, 0, 1, 1], [], []>} : vector<16x32xf32>, vector<32x32xf32>, vector<16x32xf32> -> vector<16x32xf32>
    %c0_5 = arith.constant 0 : index
    %c0_6 = arith.constant 0 : index
    %4 = vector.load %arg4[%c0_5, %c0_6] : memref<32x32xf32, #tpu.memory_space<vmem>>, vector<32x32xf32>
    %cst_7 = arith.constant dense<0.000000e+00> : vector<16x32xf32>
    %5 = tpu.matmul %1, %4, %cst_7 {dimension_numbers = #tpu.dot_dimension_numbers<[1], [0], [0], [1], [0, 0, 1, 1], [], []>} : vector<16x32xf32>, vector<32x32xf32>, vector<16x32xf32> -> vector<16x32xf32>
    %6 = arith.addf %3, %5 : vector<16x32xf32>
    %c0_8 = arith.constant 0 : index
    %c0_9 = arith.constant 0 : index
    %7 = vector.load %arg5[%c0_8, %c0_9] : memref<1x32xf32, #tpu.memory_space<vmem>>, vector<1x32xf32>
    %8 = vector.broadcast %7 : vector<1x32xf32> to vector<16x32xf32>
    %9 = arith.addf %6, %8 : vector<16x32xf32>
    %10 = arith.negf %9 : vector<16x32xf32>
    %11 = math.exp %10 : vector<16x32xf32>
    %cst_10 = arith.constant 1.000000e+00 : f32
    %12 = vector.broadcast %cst_10 : f32 to vector<16x32xf32>
    %13 = arith.addf %12, %11 : vector<16x32xf32>
    %14 = arith.divf %12, %13 : vector<16x32xf32>
    %15 = arith.mulf %0, %14 : vector<16x32xf32>
    %c0_11 = arith.constant 0 : index
    %c0_12 = arith.constant 0 : index
    %16 = vector.load %arg6[%c0_11, %c0_12] : memref<16x64xf32, #tpu.memory_space<vmem>>, vector<16x32xf32>
    tpu.vector_store %arg6[%c0_11, %c0_12], %15 {strides = array<i32>} : memref<16x64xf32, #tpu.memory_space<vmem>>, vector<16x32xf32>,
    %cst_13 = arith.constant 1.000000e+00 : f32
    %17 = vector.broadcast %cst_13 : f32 to vector<16x32xf32>
    %18 = arith.subf %17, %14 : vector<16x32xf32>
    %19 = arith.mulf %1, %18 : vector<16x32xf32>
    %c0_14 = arith.constant 0 : index
    %c32 = arith.constant 32 : index
    %20 = vector.load %arg6[%c0_14, %c32] : memref<16x64xf32, #tpu.memory_space<vmem>>, vector<16x32xf32>
    tpu.vector_store %arg6[%c0_14, %c32], %19 {strides = array<i32>} : memref<16x64xf32, #tpu.memory_space<vmem>>, vector<16x32xf32>,
    return
  }
  func.func @transform_0(%arg0: i32) -> (i32, i32) {
    %c0_i32 = arith.constant 0 : i32
    %c0_i32_0 = arith.constant 0 : i32
    return %arg0, %c0_i32 : i32, i32
  }
  func.func @transform_1(%arg0: i32) -> (i32, i32) {
    %c0_i32 = arith.constant 0 : i32
    %c0_i32_0 = arith.constant 0 : i32
    return %arg0, %c0_i32 : i32, i32
  }
  func.func @transform_2(%arg0: i32) -> (i32, i32) {
    %c0_i32 = arith.constant 0 : i32
    %c0_i32_0 = arith.constant 0 : i32
    %c0_i32_1 = arith.constant 0 : i32
    return %c0_i32, %c0_i32_0 : i32, i32
  }
  func.func @transform_3(%arg0: i32) -> (i32, i32) {
    %c0_i32 = arith.constant 0 : i32
    %c0_i32_0 = arith.constant 0 : i32
    %c0_i32_1 = arith.constant 0 : i32
    return %c0_i32, %c0_i32_0 : i32, i32
  }
  func.func @transform_4(%arg0: i32) -> (i32, i32) {
    %c0_i32 = arith.constant 0 : i32
    %c0_i32_0 = arith.constant 0 : i32
    %c0_i32_1 = arith.constant 0 : i32
    return %c0_i32, %c0_i32_0 : i32, i32
  }
  func.func @transform_5(%arg0: i32) -> (i32, i32) {
    %c0_i32 = arith.constant 0 : i32
    %c0_i32_0 = arith.constant 0 : i32
    return %arg0, %c0_i32 : i32, i32
  }
}

</mosaic_0001>

<llo_original>
// kernel: tpu_custom_call.1
$region0: #{tpu_custom_call.1}
  #allocation0 [shape = 'u32[]', space=smem, size = 0x4, offset = 0x4, fixed_abs, tag = 'smem constant byte address 0x4 - core index']
  #allocation1 [shape = 'u32[144,128]{1,0:T(1,128)}', space=vmem, size = 0x12000, scoped, tag = 'internal scratch']
  %s0 = inlined_call_operand.hbm [shape: f32[16,32], index: 0, kind: input, shape index: {}]
  %s1 = inlined_call_operand.hbm [shape: f32[16,32], index: 1, kind: input, shape index: {}]
  %s2 = inlined_call_operand.hbm [shape: f32[32,32], index: 2, kind: input, shape index: {}]
  %s3 = inlined_call_operand.hbm [shape: f32[32,32], index: 3, kind: input, shape index: {}]
  %s4 = inlined_call_operand.vmem [shape: f32[1,32], index: 4, kind: input, shape index: {}]
  %s5 = inlined_call_operand.hbm [shape: f32[16,64], index: 5, kind: output, shape index: {}]
  %s6 = sld [smem:[#allocation0]]
  $region46: #{tpu_custom_call.1} parent=0
    _
  %s8 = ssub.s32 1, %s6
  %s9 = scalar_select 0, %s8, %s6
  $region1: #{tpu_custom_call.1} parent=0
    #allocation2 [shape = 'u8[8192]{0}', space=vmem, size = 0x2000, scoped, tag = 'input window, operand 0, single buffered']
    #allocation3 [shape = 's32[1]{0}', space=sflag, size = 0x4, scoped, tag = 'scoped memory for tpu_custom_call.1']
    #allocation4 [shape = 's32[1]{0}', space=sflag, size = 0x4, scoped, tag = 'scoped memory for tpu_custom_call.1']
    #allocation5 [shape = 'u8[8192]{0}', space=vmem, size = 0x2000, scoped, tag = 'input window, operand 1, single buffered']
    #allocation6 [shape = 's32[1]{0}', space=sflag, size = 0x4, scoped, tag = 'scoped memory for tpu_custom_call.1']
    #allocation7 [shape = 'u8[16384]{0}', space=vmem, size = 0x4000, scoped, tag = 'input window, operand 2, single buffered']
    #allocation8 [shape = 'u8[16384]{0}', space=vmem, size = 0x4000, scoped, tag = 'input window, operand 3, single buffered']
    #allocation9 [shape = 's32[1]{0}', space=sflag, size = 0x4, scoped, tag = 'scoped memory for tpu_custom_call.1']
    #allocation10 [shape = 'u8[8192]{0}', space=vmem, size = 0x2000, scoped, tag = 'output window, operand 0, single buffered']
    %10 = vsyncpa [#allocation3], 0
    %11 = vsyncpa [#allocation6], 0
    %12 = vsyncpa [#allocation9], 0
    %13 = vsyncpa [#allocation4], 0
    // Predicated region
    $region2: #{tpu_custom_call.1} parent=1 // pred_check
      _
    $region3: #{tpu_custom_call.1} parent=1 // pred_check_branch
      %15 = sbr.rel (0) target = $region5
    $region4: #{tpu_custom_call.1} parent=1 // pred_region
      %s17 = ssub.s32 256, 256
      %18 = vsyncadd [#allocation3], %s17
      %s19 = sshll.u32 [#allocation2], 4
      %s20 = int_to_ptr.vmem [resolvable:$true] %s19
      %25 = dma.hbm_to_vmem [thread:$0]  %s0, 256, %s20, [#allocation3], 128, 128, 8
    $region5: #{tpu_custom_call.1} parent=1 // pred_fallthru
      _
    // Predicated region
    $region6: #{tpu_custom_call.1} parent=1 // pred_check
      _
    $region7: #{tpu_custom_call.1} parent=1 // pred_check_branch
      %27 = sbr.rel (0) target = $region9
    $region8: #{tpu_custom_call.1} parent=1 // pred_region
      %s29 = ssub.s32 256, 256
      %30 = vsyncadd [#allocation6], %s29
      %s31 = sshll.u32 [#allocation5], 4
      %s32 = int_to_ptr.vmem [resolvable:$true] %s31
      %37 = dma.hbm_to_vmem [thread:$0]  %s1, 256, %s32, [#allocation6], 128, 128, 8
    $region9: #{tpu_custom_call.1} parent=1 // pred_fallthru
      _
    // Predicated region
    $region10: #{tpu_custom_call.1} parent=1 // pred_check
      _
    $region11: #{tpu_custom_call.1} parent=1 // pred_check_branch
      %39 = sbr.rel (0) target = $region13
    $region12: #{tpu_custom_call.1} parent=1 // pred_region
      %s41 = ssub.s32 512, 512
      %42 = vsyncadd [#allocation6], %s41
      %s43 = sshll.u32 [#allocation7], 4
      %s44 = int_to_ptr.vmem [resolvable:$true] %s43
      %49 = dma.hbm_to_vmem [thread:$0]  %s2, 512, %s44, [#allocation6], 128, 128, 8
    $region13: #{tpu_custom_call.1} parent=1 // pred_fallthru
      _
    // Predicated region
    $region14: #{tpu_custom_call.1} parent=1 // pred_check
      _
    $region15: #{tpu_custom_call.1} parent=1 // pred_check_branch
      %51 = sbr.rel (0) target = $region17
    $region16: #{tpu_custom_call.1} parent=1 // pred_region
      %s53 = ssub.s32 512, 512
      %54 = vsyncadd [#allocation9], %s53
      %s55 = sshll.u32 [#allocation8], 4
      %s56 = int_to_ptr.vmem [resolvable:$true] %s55
      %61 = dma.hbm_to_vmem [thread:$0]  %s3, 512, %s56, [#allocation9], 128, 128, 8
    $region17: #{tpu_custom_call.1} parent=1 // pred_fallthru
      _
    // Predicated region
    $region18: #{tpu_custom_call.1} parent=1 // pred_check
      _
    $region19: #{tpu_custom_call.1} parent=1 // pred_check_branch
      %63 = sbr.rel (0) target = $region21
    $region20: #{tpu_custom_call.1} parent=1 // pred_region
      _
    $region21: #{tpu_custom_call.1} parent=1 // pred_fallthru
      _
    // Predicated region
    $region22: #{tpu_custom_call.1} parent=1 // pred_check
      _
    $region23: #{tpu_custom_call.1} parent=1 // pred_check_branch
      %65 = sbr.rel (0) target = $region25
    $region24: #{tpu_custom_call.1} parent=1 // pred_region
      %66 = dma.done [#allocation3], 256
    $region25: #{tpu_custom_call.1} parent=1 // pred_fallthru
      _
    // Predicated region
    $region26: #{tpu_custom_call.1} parent=1 // pred_check
      _
    $region27: #{tpu_custom_call.1} parent=1 // pred_check_branch
      %68 = sbr.rel (0) target = $region29
    $region28: #{tpu_custom_call.1} parent=1 // pred_region
      %69 = dma.done [#allocation6], 256
    $region29: #{tpu_custom_call.1} parent=1 // pred_fallthru
      _
    // Predicated region
    $region30: #{tpu_custom_call.1} parent=1 // pred_check
      _
    $region31: #{tpu_custom_call.1} parent=1 // pred_check_branch
      %71 = sbr.rel (0) target = $region33
    $region32: #{tpu_custom_call.1} parent=1 // pred_region
      %72 = dma.done [#allocation6], 512
    $region33: #{tpu_custom_call.1} parent=1 // pred_fallthru
      _
    // Predicated region
    $region34: #{tpu_custom_call.1} parent=1 // pred_check
      _
    $region35: #{tpu_custom_call.1} parent=1 // pred_check_branch
      %74 = sbr.rel (0) target = $region37
    $region36: #{tpu_custom_call.1} parent=1 // pred_region
      %75 = dma.done [#allocation9], 512
    $region37: #{tpu_custom_call.1} parent=1 // pred_fallthru
      _
    %v76 = vld [vmem:[#allocation2] sm:$0xff]
    %v77 = vld [vmem:[#allocation2 + $0x8] sm:$0xff]
    %v78 = vld [vmem:[#allocation5] sm:$0xff]
    %v79 = vld [vmem:[#allocation5 + $0x8] sm:$0xff]
    %v80 = vld [vmem:[#allocation7] sm:$0xff]
    %v81 = vld [vmem:[#allocation7 + $0x8] sm:$0xff]
    %v82 = vld [vmem:[#allocation7 + $0x10] sm:$0xff]
    %v83 = vld [vmem:[#allocation7 + $0x18] sm:$0xff]
    %v84 = vld [vmem:[#allocation8] sm:$0xff]
    %v85 = vld [vmem:[#allocation8 + $0x8] sm:$0xff]
    %v86 = vld [vmem:[#allocation8 + $0x10] sm:$0xff]
    %v87 = vld [vmem:[#allocation8 + $0x18] sm:$0xff]
    %vm88 = vcmask 261120
    %v90 = vsel %vm88, %v78, 0
    %v93 = vsel %vm88, %v79, 0
    %95 = vmatprep.subr.mxu0 0.0
    %96 = vmatpush1.msra.mxu0 %v84
    %97 = vmatprep.subr.mxu0 0.0
    %98 = vmatpush1.msra.mxu0 %v85
    %99 = vmatprep.subr.mxu0 0.0
    %100 = vmatpush1.msra.mxu0 %v86
    %101 = vmatprep.subr.mxu0 0.0
    %102 = vmatpush1.msra.mxu0 %v87
    %103 = vmatprep.subr.mxu0 0.0
    %104 = vmatpush1.msra.mxu0 0.0
    %105 = vmatprep.subr.mxu0 0.0
    %106 = vmatpush1.msra.mxu0 0.0
    %107 = vmatprep.subr.mxu0 0.0
    %108 = vmatpush1.msra.mxu0 0.0
    %109 = vmatprep.subr.mxu0 0.0
    %110 = vmatpush1.msra.mxu0 0.0
    %111 = vmatprep.subr.mxu0 0.0
    %112 = vmatpush1.msra.mxu0 0.0
    %113 = vmatprep.subr.mxu0 0.0
    %114 = vmatpush1.msra.mxu0 0.0
    %115 = vmatprep.subr.mxu0 0.0
    %116 = vmatpush1.msra.mxu0 0.0
    %117 = vmatprep.subr.mxu0 0.0
    %118 = vmatpush1.msra.mxu0 0.0
    %119 = vmatprep.subr.mxu0 0.0
    %120 = vmatpush1.msra.mxu0 0.0
    %121 = vmatprep.subr.mxu0 0.0
    %122 = vmatpush1.msra.mxu0 0.0
    %123 = vmatprep.subr.mxu0 0.0
    %124 = vmatpush1.msra.mxu0 0.0
    %125 = vmatprep.subr.mxu0 0.0
    %126 = vmatpush1.msra.mxu0 0.0
    %127 = vmatprep.subr.mxu0 0.0
    %128 = vmatpush1.msra.mxu0 0.0
    %129 = vmatprep.subr.mxu0 0.0
    %130 = vmatpush1.msra.mxu0 0.0
    %131 = vmatprep.subr.mxu0 0.0
    %132 = vmatpush1.msra.mxu0 0.0
    %133 = vmatprep.subr.mxu0 0.0
    %134 = vmatpush1.msra.mxu0 0.0
    %135 = vmatprep.subr.mxu0 0.0
    %136 = vmatpush1.msra.mxu0 0.0
    %137 = vmatprep.subr.mxu0 0.0
    %138 = vmatpush1.msra.mxu0 0.0
    %139 = vmatprep.subr.mxu0 0.0
    %140 = vmatpush1.msra.mxu0 0.0
    %141 = vmatprep.subr.mxu0 0.0
    %142 = vmatpush1.msra.mxu0 0.0
    %143 = vmatprep.subr.mxu0 0.0
    %144 = vmatpush1.msra.mxu0 0.0
    %145 = vmatprep.subr.mxu0 0.0
    %146 = vmatpush1.msra.mxu0 0.0
    %147 = vmatprep.subr.mxu0 0.0
    %148 = vmatpush1.msra.mxu0 0.0
    %149 = vmatprep.subr.mxu0 0.0
    %150 = vmatpush1.msra.mxu0 0.0
    %151 = vmatprep.subr.mxu0 0.0
    %152 = vmatpush1.msra.mxu0 0.0
    %153 = vmatprep.subr.mxu0 0.0
    %154 = vmatpush1.msra.mxu0 0.0
    %155 = vmatprep.subr.mxu0 0.0
    %156 = vmatpush1.msra.mxu0 0.0
    %157 = vmatprep.subr.mxu0 0.0
    %158 = vmatpush1.msra.mxu0 0.0
    %159 = vmatprep.mubr.f32.mxu0 0.0
    %160 = vmatmul.mubr.f32.gmra.mrb[0].mxu0 %v90
    %v161 = vpop.f32.mrb[0].mxu0
    %v162 = vadd.f32 0.0, %v161
    %v163 = vpop.f32.mrb[0].mxu0
    %164 = vmatprep.mubr.f32.mxu0 0.0
    %165 = vmatmul.mubr.f32.gmra.mrb[0].mxu0 %v93
    %v166 = vpop.f32.mrb[0].mxu0
    %v167 = vadd.f32 0.0, %v166
    %v168 = vpop.f32.mrb[0].mxu0
    %169 = vdwg.mxu0
    %v171 = vsel %vm88, %v76, 0
    %v174 = vsel %vm88, %v77, 0
    %176 = vmatprep.subr.mxu0 0.0
    %177 = vmatpush1.msra.mxu0 %v80
    %178 = vmatprep.subr.mxu0 0.0
    %179 = vmatpush1.msra.mxu0 %v81
    %180 = vmatprep.subr.mxu0 0.0
    %181 = vmatpush1.msra.mxu0 %v82
    %182 = vmatprep.subr.mxu0 0.0
    %183 = vmatpush1.msra.mxu0 %v83
    %184 = vmatprep.subr.mxu0 0.0
    %185 = vmatpush1.msra.mxu0 0.0
    %186 = vmatprep.subr.mxu0 0.0
    %187 = vmatpush1.msra.mxu0 0.0
    %188 = vmatprep.subr.mxu0 0.0
    %189 = vmatpush1.msra.mxu0 0.0
    %190 = vmatprep.subr.mxu0 0.0
    %191 = vmatpush1.msra.mxu0 0.0
    %192 = vmatprep.subr.mxu0 0.0
    %193 = vmatpush1.msra.mxu0 0.0
    %194 = vmatprep.subr.mxu0 0.0
    %195 = vmatpush1.msra.mxu0 0.0
    %196 = vmatprep.subr.mxu0 0.0
    %197 = vmatpush1.msra.mxu0 0.0
    %198 = vmatprep.subr.mxu0 0.0
    %199 = vmatpush1.msra.mxu0 0.0
    %200 = vmatprep.subr.mxu0 0.0
    %201 = vmatpush1.msra.mxu0 0.0
    %202 = vmatprep.subr.mxu0 0.0
    %203 = vmatpush1.msra.mxu0 0.0
    %204 = vmatprep.subr.mxu0 0.0
    %205 = vmatpush1.msra.mxu0 0.0
    %206 = vmatprep.subr.mxu0 0.0
    %207 = vmatpush1.msra.mxu0 0.0
    %208 = vmatprep.subr.mxu0 0.0
    %209 = vmatpush1.msra.mxu0 0.0
    %210 = vmatprep.subr.mxu0 0.0
    %211 = vmatpush1.msra.mxu0 0.0
    %212 = vmatprep.subr.mxu0 0.0
    %213 = vmatpush1.msra.mxu0 0.0
    %214 = vmatprep.subr.mxu0 0.0
    %215 = vmatpush1.msra.mxu0 0.0
    %216 = vmatprep.subr.mxu0 0.0
    %217 = vmatpush1.msra.mxu0 0.0
    %218 = vmatprep.subr.mxu0 0.0
    %219 = vmatpush1.msra.mxu0 0.0
    %220 = vmatprep.subr.mxu0 0.0
    %221 = vmatpush1.msra.mxu0 0.0
    %222 = vmatprep.subr.mxu0 0.0
    %223 = vmatpush1.msra.mxu0 0.0
    %224 = vmatprep.subr.mxu0 0.0
    %225 = vmatpush1.msra.mxu0 0.0
    %226 = vmatprep.subr.mxu0 0.0
    %227 = vmatpush1.msra.mxu0 0.0
    %228 = vmatprep.subr.mxu0 0.0
    %229 = vmatpush1.msra.mxu0 0.0
    %230 = vmatprep.subr.mxu0 0.0
    %231 = vmatpush1.msra.mxu0 0.0
    %232 = vmatprep.subr.mxu0 0.0
    %233 = vmatpush1.msra.mxu0 0.0
    %234 = vmatprep.subr.mxu0 0.0
    %235 = vmatpush1.msra.mxu0 0.0
    %236 = vmatprep.subr.mxu0 0.0
    %237 = vmatpush1.msra.mxu0 0.0
    %238 = vmatprep.subr.mxu0 0.0
    %239 = vmatpush1.msra.mxu0 0.0
    %240 = vmatprep.mubr.f32.mxu0 0.0
    %241 = vmatmul.mubr.f32.gmra.mrb[0].mxu0 %v171
    %v242 = vpop.f32.mrb[0].mxu0
    %v243 = vadd.f32 %v162, %v242
    %v244 = vpop.f32.mrb[0].mxu0
    %245 = vmatprep.mubr.f32.mxu0 0.0
    %246 = vmatmul.mubr.f32.gmra.mrb[0].mxu0 %v174
    %v247 = vpop.f32.mrb[0].mxu0
    %v248 = vadd.f32 %v167, %v247
    %v249 = vpop.f32.mrb[0].mxu0
    %250 = vdwg.mxu0
    %v251 = vld [vmem:[%s4] sm:$0x1]
    %v253 = vlaneseq
    %v254 = vshrl.u32 %v253, 7
    %v255 = vsub.s32 0, %v254
    %v256 = vrot.slane %v251, %v255
    %v258 = vadd.f32 %v243, %v256
    %v259 = vadd.f32 %v248, %v256
    %v260 = vxor.u32 %v258, 2147483648
    %v261 = vxor.u32 %v259, 2147483648
    %v262 = vmul.f32 %v260, 1.442695
    %v263 = vpow.pop %v262
    %v264 = vmul.f32 %v261, 1.442695
    %v265 = vpow.pop %v264
    %v266 = vadd.f32 %v263, 1.0
    %v267 = vadd.f32 %v265, 1.0
    %v268 = vrcp.pop %v266
    %v269 = vmul.f32 1.0, %v268
    %v270 = vrcp.pop %v267
    %v271 = vmul.f32 1.0, %v270
    %v272 = vmul.f32 %v76, %v269
    %v273 = vmul.f32 %v77, %v271
    %274 = vst.msk [vmem:[#allocation10] sm:$0xff] %vm88, %v272
    %275 = vst.msk [vmem:[#allocation10 + $0x8] sm:$0xff] %vm88, %v273
    %v276 = vsub.f32 1.0, %v269
    %v277 = vsub.f32 1.0, %v271
    %v278 = vmul.f32 %v78, %v276
    %v279 = vmul.f32 %v79, %v277
    %282 = vrot.lane.b32.xlu0 %v278, 32
    %v283 = vpop.permute.xlu0 %282
    %284 = vrot.lane.b32.xlu0 %v279, 32
    %v285 = vpop.permute.xlu0 %284
    %vm288 = vcmask 523520
    %289 = vst.msk [vmem:[#allocation10] sm:$0xff] %vm288, %v283
    %290 = vst.msk [vmem:[#allocation10 + $0x8] sm:$0xff] %vm288, %v285
    // Predicated region
    $region38: #{tpu_custom_call.1} parent=1 // pred_check
      _
    $region39: #{tpu_custom_call.1} parent=1 // pred_check_branch
      %292 = sbr.rel (0) target = $region41
    $region40: #{tpu_custom_call.1} parent=1 // pred_region
      %s294 = ssub.s32 256, 256
      %295 = vsyncadd [#allocation4], %s294
      %s296 = sshll.u32 [#allocation10], 4
      %s297 = int_to_ptr.vmem [resolvable:$true] %s296
      %302 = dma.vmem_to_hbm [thread:$0]  %s297, 256, %s5, [#allocation4], 128, 128, 8
    $region41: #{tpu_custom_call.1} parent=1 // pred_fallthru
      _
    // Predicated region
    $region42: #{tpu_custom_call.1} parent=1 // pred_check
      _
    $region43: #{tpu_custom_call.1} parent=1 // pred_check_branch
      %304 = sbr.rel (0) target = $region45
    $region44: #{tpu_custom_call.1} parent=1 // pred_region
      %305 = dma.done [#allocation4], 256
    $region45: #{tpu_custom_call.1} parent=1 // pred_fallthru
      _
    %306 = vsyncpa [#allocation3], 1
    %307 = vsyncpa [#allocation6], 1
    %308 = vsyncpa [#allocation9], 1
    %309 = vsyncpa [#allocation4], 1

// kernel: tpu_custom_call.1
$region0: #{tpu_custom_call.1}
  #allocation0 [shape = 'u32[]', space=smem, size = 0x4, offset = 0x4, fixed_abs, tag = 'smem constant byte address 0x4 - core index']
  #allocation1 [shape = 'u32[144,128]{1,0:T(1,128)}', space=vmem, size = 0x12000, scoped, tag = 'internal scratch']
  %s0 = inlined_call_operand.hbm [shape: f32[16,32], index: 0, kind: input, shape index: {}]
  %s1 = inlined_call_operand.hbm [shape: f32[16,32], index: 1, kind: input, shape index: {}]
  %s2 = inlined_call_operand.hbm [shape: f32[32,32], index: 2, kind: input, shape index: {}]
  %s3 = inlined_call_operand.hbm [shape: f32[32,32], index: 3, kind: input, shape index: {}]
  %s4 = inlined_call_operand.vmem [shape: f32[1,32], index: 4, kind: input, shape index: {}]
  %s5 = inlined_call_operand.hbm [shape: f32[16,64], index: 5, kind: output, shape index: {}]
  %s6 = sld [smem:[#allocation0]]
  $region46: #{tpu_custom_call.1} parent=0
    _
  %s8 = ssub.s32 1, %s6
  %s9 = scalar_select 0, %s8, %s6
  $region1: #{tpu_custom_call.1} parent=0
    #allocation2 [shape = 'u8[8192]{0}', space=vmem, size = 0x2000, scoped, tag = 'input window, operand 0, single buffered']
    #allocation3 [shape = 's32[1]{0}', space=sflag, size = 0x4, scoped, tag = 'scoped memory for tpu_custom_call.1']
    #allocation4 [shape = 's32[1]{0}', space=sflag, size = 0x4, scoped, tag = 'scoped memory for tpu_custom_call.1']
    #allocation5 [shape = 'u8[8192]{0}', space=vmem, size = 0x2000, scoped, tag = 'input window, operand 1, single buffered']
    #allocation6 [shape = 's32[1]{0}', space=sflag, size = 0x4, scoped, tag = 'scoped memory for tpu_custom_call.1']
    #allocation7 [shape = 'u8[16384]{0}', space=vmem, size = 0x4000, scoped, tag = 'input window, operand 2, single buffered']
    #allocation8 [shape = 'u8[16384]{0}', space=vmem, size = 0x4000, scoped, tag = 'input window, operand 3, single buffered']
    #allocation9 [shape = 's32[1]{0}', space=sflag, size = 0x4, scoped, tag = 'scoped memory for tpu_custom_call.1']
    #allocation10 [shape = 'u8[8192]{0}', space=vmem, size = 0x2000, scoped, tag = 'output window, operand 0, single buffered']
    %10 = vsyncpa [#allocation3], 0
    %11 = vsyncpa [#allocation6], 0
    %12 = vsyncpa [#allocation9], 0
    %13 = vsyncpa [#allocation4], 0
    // Predicated region
    $region2: #{tpu_custom_call.1} parent=1 // pred_check
      _
    $region3: #{tpu_custom_call.1} parent=1 // pred_check_branch
      %15 = sbr.rel (0) target = $region5
    $region4: #{tpu_custom_call.1} parent=1 // pred_region
      %s17 = ssub.s32 256, 256
      %18 = vsyncadd [#allocation3], %s17
      %s19 = sshll.u32 [#allocation2], 4
      %s20 = int_to_ptr.vmem [resolvable:$true] %s19
      %25 = dma.hbm_to_vmem [thread:$0]  %s0, 256, %s20, [#allocation3], 128, 128, 8
    $region5: #{tpu_custom_call.1} parent=1 // pred_fallthru
      _
    // Predicated region
    $region6: #{tpu_custom_call.1} parent=1 // pred_check
      _
    $region7: #{tpu_custom_call.1} parent=1 // pred_check_branch
      %27 = sbr.rel (0) target = $region9
    $region8: #{tpu_custom_call.1} parent=1 // pred_region
      %s29 = ssub.s32 256, 256
      %30 = vsyncadd [#allocation6], %s29
      %s31 = sshll.u32 [#allocation5], 4
      %s32 = int_to_ptr.vmem [resolvable:$true] %s31
      %37 = dma.hbm_to_vmem [thread:$0]  %s1, 256, %s32, [#allocation6], 128, 128, 8
    $region9: #{tpu_custom_call.1} parent=1 // pred_fallthru
      _
    // Predicated region
    $region10: #{tpu_custom_call.1} parent=1 // pred_check
      _
    $region11: #{tpu_custom_call.1} parent=1 // pred_check_branch
      %39 = sbr.rel (0) target = $region13
    $region12: #{tpu_custom_call.1} parent=1 // pred_region
      %s41 = ssub.s32 512, 512
      %42 = vsyncadd [#allocation6], %s41
      %s43 = sshll.u32 [#allocation7], 4
      %s44 = int_to_ptr.vmem [resolvable:$true] %s43
      %49 = dma.hbm_to_vmem [thread:$0]  %s2, 512, %s44, [#allocation6], 128, 128, 8
    $region13: #{tpu_custom_call.1} parent=1 // pred_fallthru
      _
    // Predicated region
    $region14: #{tpu_custom_call.1} parent=1 // pred_check
      _
    $region15: #{tpu_custom_call.1} parent=1 // pred_check_branch
      %51 = sbr.rel (0) target = $region17
    $region16: #{tpu_custom_call.1} parent=1 // pred_region
      %s53 = ssub.s32 512, 512
      %54 = vsyncadd [#allocation9], %s53
      %s55 = sshll.u32 [#allocation8], 4
      %s56 = int_to_ptr.vmem [resolvable:$true] %s55
      %61 = dma.hbm_to_vmem [thread:$0]  %s3, 512, %s56, [#allocation9], 128, 128, 8
    $region17: #{tpu_custom_call.1} parent=1 // pred_fallthru
      _
    // Predicated region
    $region18: #{tpu_custom_call.1} parent=1 // pred_check
      _
    $region19: #{tpu_custom_call.1} parent=1 // pred_check_branch
      %63 = sbr.rel (0) target = $region21
    $region20: #{tpu_custom_call.1} parent=1 // pred_region
      _
    $region21: #{tpu_custom_call.1} parent=1 // pred_fallthru
      _
    // Predicated region
    $region22: #{tpu_custom_call.1} parent=1 // pred_check
      _
    $region23: #{tpu_custom_call.1} parent=1 // pred_check_branch
      %65 = sbr.rel (0) target = $region25
    $region24: #{tpu_custom_call.1} parent=1 // pred_region
      %66 = dma.done [#allocation3], 256
    $region25: #{tpu_custom_call.1} parent=1 // pred_fallthru
      _
    // Predicated region
    $region26: #{tpu_custom_call.1} parent=1 // pred_check
      _
    $region27: #{tpu_custom_call.1} parent=1 // pred_check_branch
      %68 = sbr.rel (0) target = $region29
    $region28: #{tpu_custom_call.1} parent=1 // pred_region
      %69 = dma.done [#allocation6], 256
    $region29: #{tpu_custom_call.1} parent=1 // pred_fallthru
      _
    // Predicated region
    $region30: #{tpu_custom_call.1} parent=1 // pred_check
      _
    $region31: #{tpu_custom_call.1} parent=1 // pred_check_branch
      %71 = sbr.rel (0) target = $region33
    $region32: #{tpu_custom_call.1} parent=1 // pred_region
      %72 = dma.done [#allocation6], 512
    $region33: #{tpu_custom_call.1} parent=1 // pred_fallthru
      _
    // Predicated region
    $region34: #{tpu_custom_call.1} parent=1 // pred_check
      _
    $region35: #{tpu_custom_call.1} parent=1 // pred_check_branch
      %74 = sbr.rel (0) target = $region37
    $region36: #{tpu_custom_call.1} parent=1 // pred_region
      %75 = dma.done [#allocation9], 512
    $region37: #{tpu_custom_call.1} parent=1 // pred_fallthru
      _
    %v76 = vld [vmem:[#allocation2] sm:$0xff]
    %v77 = vld [vmem:[#allocation2 + $0x8] sm:$0xff]
    %v78 = vld [vmem:[#allocation5] sm:$0xff]
    %v79 = vld [vmem:[#allocation5 + $0x8] sm:$0xff]
    %v80 = vld [vmem:[#allocation7] sm:$0xff]
    %v81 = vld [vmem:[#allocation7 + $0x8] sm:$0xff]
    %v82 = vld [vmem:[#allocation7 + $0x10] sm:$0xff]
    %v83 = vld [vmem:[#allocation7 + $0x18] sm:$0xff]
    %v84 = vld [vmem:[#allocation8] sm:$0xff]
    %v85 = vld [vmem:[#allocation8 + $0x8] sm:$0xff]
    %v86 = vld [vmem:[#allocation8 + $0x10] sm:$0xff]
    %v87 = vld [vmem:[#allocation8 + $0x18] sm:$0xff]
    %vm88 = vcmask 261120
    %v90 = vsel %vm88, %v78, 0
    %v93 = vsel %vm88, %v79, 0
    %95 = vmatprep.subr.mxu0 0.0
    %96 = vmatpush1.msra.mxu0 %v84
    %97 = vmatprep.subr.mxu0 0.0
    %98 = vmatpush1.msra.mxu0 %v85
    %99 = vmatprep.subr.mxu0 0.0
    %100 = vmatpush1.msra.mxu0 %v86
    %101 = vmatprep.subr.mxu0 0.0
    %102 = vmatpush1.msra.mxu0 %v87
    %103 = vmatprep.subr.mxu0 0.0
    %104 = vmatpush1.msra.mxu0 0.0
    %105 = vmatprep.subr.mxu0 0.0
    %106 = vmatpush1.msra.mxu0 0.0
    %107 = vmatprep.subr.mxu0 0.0
    %108 = vmatpush1.msra.mxu0 0.0
    %109 = vmatprep.subr.mxu0 0.0
    %110 = vmatpush1.msra.mxu0 0.0
    %111 = vmatprep.subr.mxu0 0.0
    %112 = vmatpush1.msra.mxu0 0.0
    %113 = vmatprep.subr.mxu0 0.0
    %114 = vmatpush1.msra.mxu0 0.0
    %115 = vmatprep.subr.mxu0 0.0
    %116 = vmatpush1.msra.mxu0 0.0
    %117 = vmatprep.subr.mxu0 0.0
    %118 = vmatpush1.msra.mxu0 0.0
    %119 = vmatprep.subr.mxu0 0.0
    %120 = vmatpush1.msra.mxu0 0.0
    %121 = vmatprep.subr.mxu0 0.0
    %122 = vmatpush1.msra.mxu0 0.0
    %123 = vmatprep.subr.mxu0 0.0
    %124 = vmatpush1.msra.mxu0 0.0
    %125 = vmatprep.subr.mxu0 0.0
    %126 = vmatpush1.msra.mxu0 0.0
    %127 = vmatprep.subr.mxu0 0.0
    %128 = vmatpush1.msra.mxu0 0.0
    %129 = vmatprep.subr.mxu0 0.0
    %130 = vmatpush1.msra.mxu0 0.0
    %131 = vmatprep.subr.mxu0 0.0
    %132 = vmatpush1.msra.mxu0 0.0
    %133 = vmatprep.subr.mxu0 0.0
    %134 = vmatpush1.msra.mxu0 0.0
    %135 = vmatprep.subr.mxu0 0.0
    %136 = vmatpush1.msra.mxu0 0.0
    %137 = vmatprep.subr.mxu0 0.0
    %138 = vmatpush1.msra.mxu0 0.0
    %139 = vmatprep.subr.mxu0 0.0
    %140 = vmatpush1.msra.mxu0 0.0
    %141 = vmatprep.subr.mxu0 0.0
    %142 = vmatpush1.msra.mxu0 0.0
    %143 = vmatprep.subr.mxu0 0.0
    %144 = vmatpush1.msra.mxu0 0.0
    %145 = vmatprep.subr.mxu0 0.0
    %146 = vmatpush1.msra.mxu0 0.0
    %147 = vmatprep.subr.mxu0 0.0
    %148 = vmatpush1.msra.mxu0 0.0
    %149 = vmatprep.subr.mxu0 0.0
    %150 = vmatpush1.msra.mxu0 0.0
    %151 = vmatprep.subr.mxu0 0.0
    %152 = vmatpush1.msra.mxu0 0.0
    %153 = vmatprep.subr.mxu0 0.0
    %154 = vmatpush1.msra.mxu0 0.0
    %155 = vmatprep.subr.mxu0 0.0
    %156 = vmatpush1.msra.mxu0 0.0
    %157 = vmatprep.subr.mxu0 0.0
    %158 = vmatpush1.msra.mxu0 0.0
    %159 = vmatprep.mubr.f32.mxu0 0.0
    %160 = vmatmul.mubr.f32.gmra.mrb[0].mxu0 %v90
    %v161 = vpop.f32.mrb[0].mxu0
    %v162 = vadd.f32 0.0, %v161
    %v163 = vpop.f32.mrb[0].mxu0
    %164 = vmatprep.mubr.f32.mxu0 0.0
    %165 = vmatmul.mubr.f32.gmra.mrb[0].mxu0 %v93
    %v166 = vpop.f32.mrb[0].mxu0
    %v167 = vadd.f32 0.0, %v166
    %v168 = vpop.f32.mrb[0].mxu0
    %169 = vdwg.mxu0
    %v171 = vsel %vm88, %v76, 0
    %v174 = vsel %vm88, %v77, 0
    %176 = vmatprep.subr.mxu0 0.0
    %177 = vmatpush1.msra.mxu0 %v80
    %178 = vmatprep.subr.mxu0 0.0
    %179 = vmatpush1.msra.mxu0 %v81
    %180 = vmatprep.subr.mxu0 0.0
    %181 = vmatpush1.msra.mxu0 %v82
    %182 = vmatprep.subr.mxu0 0.0
    %183 = vmatpush1.msra.mxu0 %v83
    %184 = vmatprep.subr.mxu0 0.0
    %185 = vmatpush1.msra.mxu0 0.0
    %186 = vmatprep.subr.mxu0 0.0
    %187 = vmatpush1.msra.mxu0 0.0
    %188 = vmatprep.subr.mxu0 0.0
    %189 = vmatpush1.msra.mxu0 0.0
    %190 = vmatprep.subr.mxu0 0.0
    %191 = vmatpush1.msra.mxu0 0.0
    %192 = vmatprep.subr.mxu0 0.0
    %193 = vmatpush1.msra.mxu0 0.0
    %194 = vmatprep.subr.mxu0 0.0
    %195 = vmatpush1.msra.mxu0 0.0
    %196 = vmatprep.subr.mxu0 0.0
    %197 = vmatpush1.msra.mxu0 0.0
    %198 = vmatprep.subr.mxu0 0.0
    %199 = vmatpush1.msra.mxu0 0.0
    %200 = vmatprep.subr.mxu0 0.0
    %201 = vmatpush1.msra.mxu0 0.0
    %202 = vmatprep.subr.mxu0 0.0
    %203 = vmatpush1.msra.mxu0 0.0
    %204 = vmatprep.subr.mxu0 0.0
    %205 = vmatpush1.msra.mxu0 0.0
    %206 = vmatprep.subr.mxu0 0.0
    %207 = vmatpush1.msra.mxu0 0.0
    %208 = vmatprep.subr.mxu0 0.0
    %209 = vmatpush1.msra.mxu0 0.0
    %210 = vmatprep.subr.mxu0 0.0
    %211 = vmatpush1.msra.mxu0 0.0
    %212 = vmatprep.subr.mxu0 0.0
    %213 = vmatpush1.msra.mxu0 0.0
    %214 = vmatprep.subr.mxu0 0.0
    %215 = vmatpush1.msra.mxu0 0.0
    %216 = vmatprep.subr.mxu0 0.0
    %217 = vmatpush1.msra.mxu0 0.0
    %218 = vmatprep.subr.mxu0 0.0
    %219 = vmatpush1.msra.mxu0 0.0
    %220 = vmatprep.subr.mxu0 0.0
    %221 = vmatpush1.msra.mxu0 0.0
    %222 = vmatprep.subr.mxu0 0.0
    %223 = vmatpush1.msra.mxu0 0.0
    %224 = vmatprep.subr.mxu0 0.0
    %225 = vmatpush1.msra.mxu0 0.0
    %226 = vmatprep.subr.mxu0 0.0
    %227 = vmatpush1.msra.mxu0 0.0
    %228 = vmatprep.subr.mxu0 0.0
    %229 = vmatpush1.msra.mxu0 0.0
    %230 = vmatprep.subr.mxu0 0.0
    %231 = vmatpush1.msra.mxu0 0.0
    %232 = vmatprep.subr.mxu0 0.0
    %233 = vmatpush1.msra.mxu0 0.0
    %234 = vmatprep.subr.mxu0 0.0
    %235 = vmatpush1.msra.mxu0 0.0
    %236 = vmatprep.subr.mxu0 0.0
    %237 = vmatpush1.msra.mxu0 0.0
    %238 = vmatprep.subr.mxu0 0.0
    %239 = vmatpush1.msra.mxu0 0.0
    %240 = vmatprep.mubr.f32.mxu0 0.0
    %241 = vmatmul.mubr.f32.gmra.mrb[0].mxu0 %v171
    %v242 = vpop.f32.mrb[0].mxu0
    %v243 = vadd.f32 %v162, %v242
    %v244 = vpop.f32.mrb[0].mxu0
    %245 = vmatprep.mubr.f32.mxu0 0.0
    %246 = vmatmul.mubr.f32.gmra.mrb[0].mxu0 %v174
    %v247 = vpop.f32.mrb[0].mxu0
    %v248 = vadd.f32 %v167, %v247
    %v249 = vpop.f32.mrb[0].mxu0
    %250 = vdwg.mxu0
    %v251 = vld [vmem:[%s4] sm:$0x1]
    %v253 = vlaneseq
    %v254 = vshrl.u32 %v253, 7
    %v255 = vsub.s32 0, %v254
    %v256 = vrot.slane %v251, %v255
    %v258 = vadd.f32 %v243, %v256
    %v259 = vadd.f32 %v248, %v256
    %v260 = vxor.u32 %v258, 2147483648
    %v261 = vxor.u32 %v259, 2147483648
    %v262 = vmul.f32 %v260, 1.442695
    %v263 = vpow.pop %v262
    %v264 = vmul.f32 %v261, 1.442695
    %v265 = vpow.pop %v264
    %v266 = vadd.f32 %v263, 1.0
    %v267 = vadd.f32 %v265, 1.0
    %v268 = vrcp.pop %v266
    %v269 = vmul.f32 1.0, %v268
    %v270 = vrcp.pop %v267
    %v271 = vmul.f32 1.0, %v270
    %v272 = vmul.f32 %v76, %v269
    %v273 = vmul.f32 %v77, %v271
    %274 = vst.msk [vmem:[#allocation10] sm:$0xff] %vm88, %v272
    %275 = vst.msk [vmem:[#allocation10 + $0x8] sm:$0xff] %vm88, %v273
    %v276 = vsub.f32 1.0, %v269
    %v277 = vsub.f32 1.0, %v271
    %v278 = vmul.f32 %v78, %v276
    %v279 = vmul.f32 %v79, %v277
    %282 = vrot.lane.b32.xlu0 %v278, 32
    %v283 = vpop.permute.xlu0 %282
    %284 = vrot.lane.b32.xlu0 %v279, 32
    %v285 = vpop.permute.xlu0 %284
    %vm288 = vcmask 523520
    %289 = vst.msk [vmem:[#allocation10] sm:$0xff] %vm288, %v283
    %290 = vst.msk [vmem:[#allocation10 + $0x8] sm:$0xff] %vm288, %v285
    // Predicated region
    $region38: #{tpu_custom_call.1} parent=1 // pred_check
      _
    $region39: #{tpu_custom_call.1} parent=1 // pred_check_branch
      %292 = sbr.rel (0) target = $region41
    $region40: #{tpu_custom_call.1} parent=1 // pred_region
      %s294 = ssub.s32 256, 256
      %295 = vsyncadd [#allocation4], %s294
      %s296 = sshll.u32 [#allocation10], 4
      %s297 = int_to_ptr.vmem [resolvable:$true] %s296
      %302 = dma.vmem_to_hbm [thread:$0]  %s297, 256, %s5, [#allocation4], 128, 128, 8
    $region41: #{tpu_custom_call.1} parent=1 // pred_fallthru
      _
    // Predicated region
    $region42: #{tpu_custom_call.1} parent=1 // pred_check
      _
    $region43: #{tpu_custom_call.1} parent=1 // pred_check_branch
      %304 = sbr.rel (0) target = $region45
    $region44: #{tpu_custom_call.1} parent=1 // pred_region
      %305 = dma.done [#allocation4], 256
    $region45: #{tpu_custom_call.1} parent=1 // pred_fallthru
      _
    %306 = vsyncpa [#allocation3], 1
    %307 = vsyncpa [#allocation6], 1
    %308 = vsyncpa [#allocation9], 1
    %309 = vsyncpa [#allocation4], 1

</llo_original>
